<compile_context>
chip_gen: v5e
topology: v5e:2x2
jax: 0.10.0
libtpu: 0.0.40
codegen_flags: <defaults>
</compile_context>

<pallas_src>
import functools

import jax
import jax.numpy as jnp
from jax.experimental import pallas as pl
from jax.experimental.pallas import tpu as pltpu


_TARGET_IN_BLOCK_BYTES = 8 * 1024 * 1024   # ~8 MiB of input bytes per grid step
_VMEM_LIMIT_BYTES = 48 << 20               # < v7x 64 MiB/TC; << v5e/v6e 128 MiB


def _round_up(a, m):
    return ((a + m - 1) // m) * m


def _nearest_mean_kernel(x_ref, o_ref, *, thresholds, deltas, first_label):
    """x_ref: VMEM [tile_r, lanes] (native dtype); o_ref: VMEM int16/int32."""
    x = x_ref[...]
    if x.dtype != jnp.float32:
        x = x.astype(jnp.float32)          # cast in VMEM; HBM read stays native width
    acc = jnp.full(x.shape, jnp.int32(first_label), dtype=jnp.int32)
    for t, d in zip(thresholds, deltas):   # static, tiny unrolled loop
        acc = acc + jnp.where(x >= jnp.float32(t), jnp.int32(d), jnp.int32(0))
    o_ref[...] = acc.astype(o_ref.dtype)


def _choose_tiling(n_bulk, in_itemsize):
    """Pick (lanes, rows, tile_r) for a flat bulk length (multiple of 128).

    Lane dim is a multiple of 128 dividing n_bulk; rows >= 8 when possible so
    blocks fully pack sublanes.  tile_r targets ~8 MiB of input bytes per block
    (amortizes the ~0.35 us/step overhead on all generations) and is a multiple
    of 32 for full sublane packing of int32/int16 outputs.  The grid is nudged
    to an even number of steps so v7x's two TensorCores load-balance.
    """
    lanes = 128
    for cand in (8192, 4096, 2048, 1024, 512, 256):
        if n_bulk % cand == 0 and (n_bulk // cand) >= 8:
            lanes = cand
            break
    rows = n_bulk // lanes

    target_rows = max(8, _TARGET_IN_BLOCK_BYTES // (lanes * in_itemsize))
    if rows <= target_rows:
        tile_r = rows                       # single block covers everything
    else:
        tile_r = max(8, (target_rows // 32) * 32)

    grid = pl.cdiv(rows, tile_r)
    if grid == 1 and rows > 8:
        # Split into 2 blocks so both v7x TensorCores get work.
        tile_r = max(8, _round_up(pl.cdiv(rows, 2), 8))
    elif grid > 1 and grid % 2 == 1:
        cand = max(8, _round_up(pl.cdiv(rows, grid + 1), 8))
        if pl.cdiv(rows, cand) % 2 == 0:
            tile_r = cand
    return lanes, rows, tile_r


class NearestMean:
    """JAX/Pallas port of the PyTorch NearestMean module."""

    def __init__(self, means, labels):
        assert -1 not in labels
        zipped = sorted(zip(means, labels))
        self.thresholds = [
            (zipped[i][0] + zipped[i + 1][0]) / 2.0 for i in range(len(zipped) - 1)
        ]
        self.labels = [z[1] for z in zipped]
        # Baked compile-time constants for the kernel.
        self._first_label = int(self.labels[0])
        self._deltas = tuple(
            int(self.labels[i + 1] - self.labels[i]) for i in range(len(self.labels) - 1)
        )
        self._thresholds = tuple(float(t) for t in self.thresholds)
        lo, hi = min(self.labels), max(self.labels)
        # Narrow output dtype (values identical) to cut HBM write traffic.
        self._out_dtype = jnp.int16 if (-(2 ** 15) <= lo and hi < 2 ** 15) else jnp.int32

    def _jax_classify(self, x_flat):
        """Tiny pure-JAX path for the <128-element tail (same formula)."""
        xf = x_flat.astype(jnp.float32)
        y = jnp.full(xf.shape, self._first_label, dtype=jnp.int32)
        for t, d in zip(self._thresholds, self._deltas):
            y = y + jnp.where(xf >= jnp.float32(t), jnp.int32(d), jnp.int32(0))
        return y.astype(self._out_dtype)

    def __call__(self, x):
        original_shape = x.shape
        x_flat = jnp.ravel(x)              # free for contiguous input; native dtype
        n = x_flat.shape[0]
        if n == 0:
            return jnp.zeros(original_shape, self._out_dtype)

        tail = n % 128
        n_bulk = n - tail
        if n_bulk == 0:                    # tiny input: kernel not worth launching
            return self._jax_classify(x_flat).reshape(original_shape)

        in_itemsize = x_flat.dtype.itemsize
        out_itemsize = jnp.dtype(self._out_dtype).itemsize
        lanes, rows, tile_r = _choose_tiling(n_bulk, in_itemsize)

        x_bulk = x_flat if tail == 0 else x_flat[:n_bulk]
        x2d = x_bulk.reshape(rows, lanes)

        kernel = functools.partial(
            _nearest_mean_kernel,
            thresholds=self._thresholds,
            deltas=self._deltas,
            first_label=self._first_label,
        )

        y2d = pl.pallas_call(
            kernel,
            out_shape=jax.ShapeDtypeStruct((rows, lanes), self._out_dtype),
            grid=(pl.cdiv(rows, tile_r),),
            in_specs=[pl.BlockSpec((tile_r, lanes), lambda i: (i, 0))],
            out_specs=pl.BlockSpec((tile_r, lanes), lambda i: (i, 0)),
            compiler_params=pltpu.CompilerParams(
                dimension_semantics=("parallel",),
                vmem_limit_bytes=_VMEM_LIMIT_BYTES,
            ),
            cost_estimate=pl.CostEstimate(
                flops=n_bulk * max(1, 2 * len(self._thresholds)),
                transcendentals=0,
                bytes_accessed=n_bulk * (in_itemsize + out_itemsize),
            ),
        )(x2d)

        if tail == 0:
            return y2d.reshape(original_shape)
        # TODO(synk): the concatenate still copies the bulk output once on the rare
        # ragged path (n % 128 != 0); XLA has no in-place append without donation.
        y_tail = self._jax_classify(x_flat[n_bulk:])
        return jnp.concatenate([y2d.reshape(-1), y_tail]).reshape(original_shape)


def _reference(x, thresholds, labels):
    """Pure-JAX reference matching the PyTorch loop semantics (f32 thresholds)."""
    xf = jnp.ravel(x)
    y = jnp.full(xf.shape, -1, dtype=jnp.int32)
    for i in range(len(labels) - 1):
        y = jnp.where((y == -1) & (xf < jnp.float32(thresholds[i])), labels[i], y)
    y = jnp.where(y == -1, labels[-1], y)
    return y.reshape(x.shape)


if __name__ == "__main__":
    # Deterministic model params: unsorted means + labels to exercise the sort.
    means = [2.0, -1.0, 0.5]
    labels = [7, 3, 5]
    model = NearestMean(means, labels)

    # Small NCHW-shaped input (the forward is shape-agnostic / elementwise).
    key = jax.random.PRNGKey(0)
    x = jax.random.normal(key, (2, 4, 16, 16), dtype=jnp.float32) * 2.0

    y = model(x)
    y = jax.block_until_ready(y)

    y_ref = _reference(x, model.thresholds, model.labels)
    assert y.shape == x.shape
    assert bool(jnp.all(y.astype(jnp.int32) == y_ref))
    print("KERNEL_OK")
</pallas_src>

<mosaic_0001>
module attributes {stable_mosaic.version = 11 : i64} {
  func.func @_nearest_mean_kernel(%arg0: i32, %arg1: memref<8x256xf32, #tpu.memory_space<vmem>>, %arg2: memref<8x256xi16, #tpu.memory_space<vmem>>) attributes {dimension_semantics = [#tpu.dimension_semantics<parallel>], iteration_bounds = array<i64: 1>, scalar_prefetch = 0 : i64, scratch_operands = 0 : i64, tpu.core_type = #tpu.core_type<tc>, window_params = [{transform_indices = @transform_0, window_bounds = array<i64: 8, 256>}, {transform_indices = @transform_1, window_bounds = array<i64: 8, 256>}]} {
    %c0 = arith.constant 0 : index
    %c0_0 = arith.constant 0 : index
    %0 = vector.load %arg1[%c0, %c0_0] : memref<8x256xf32, #tpu.memory_space<vmem>>, vector<8x256xf32>
    %c3_i32 = arith.constant 3 : i32
    %1 = vector.broadcast %c3_i32 : i32 to vector<8x256xi32>
    %cst = arith.constant -2.500000e-01 : f32
    %2 = vector.broadcast %cst : f32 to vector<8x256xf32>
    %3 = arith.cmpf oge, %0, %2 : vector<8x256xf32>
    %c2_i32 = arith.constant 2 : i32
    %c0_i32 = arith.constant 0 : i32
    %4 = vector.broadcast %c2_i32 : i32 to vector<8x256xi32>
    %5 = vector.broadcast %c0_i32 : i32 to vector<8x256xi32>
    %6 = arith.select %3, %4, %5 : vector<8x256xi1>, vector<8x256xi32>
    %7 = arith.addi %1, %6 : vector<8x256xi32>
    %cst_1 = arith.constant 1.250000e+00 : f32
    %8 = vector.broadcast %cst_1 : f32 to vector<8x256xf32>
    %9 = arith.cmpf oge, %0, %8 : vector<8x256xf32>
    %c2_i32_2 = arith.constant 2 : i32
    %c0_i32_3 = arith.constant 0 : i32
    %10 = vector.broadcast %c2_i32_2 : i32 to vector<8x256xi32>
    %11 = vector.broadcast %c0_i32_3 : i32 to vector<8x256xi32>
    %12 = arith.select %9, %10, %11 : vector<8x256xi1>, vector<8x256xi32>
    %13 = arith.addi %7, %12 : vector<8x256xi32>
    %14 = arith.trunci %13 : vector<8x256xi32> to vector<8x256xi16>
    %c0_4 = arith.constant 0 : index
    %c0_5 = arith.constant 0 : index
    %15 = vector.load %arg2[%c0_4, %c0_5] : memref<8x256xi16, #tpu.memory_space<vmem>>, vector<8x256xi16>
    tpu.vector_store %arg2[%c0_4, %c0_5], %14 {strides = array<i32>} : memref<8x256xi16, #tpu.memory_space<vmem>>, vector<8x256xi16>,
    return
  }
  func.func @transform_0(%arg0: i32) -> (i32, i32) {
    %c0_i32 = arith.constant 0 : i32
    %c0_i32_0 = arith.constant 0 : i32
    return %arg0, %c0_i32 : i32, i32
  }
  func.func @transform_1(%arg0: i32) -> (i32, i32) {
    %c0_i32 = arith.constant 0 : i32
    %c0_i32_0 = arith.constant 0 : i32
    return %arg0, %c0_i32 : i32, i32
  }
}

</mosaic_0001>

<llo_original>
// kernel: tpu_custom_call.1
$region0: #{tpu_custom_call.1}
  #allocation0 [shape = 'u32[]', space=smem, size = 0x4, offset = 0x4, fixed_abs, tag = 'smem constant byte address 0x4 - core index']
  #allocation1 [shape = 'u32[72,128]{1,0:T(1,128)}', space=vmem, size = 0x9000, scoped, tag = 'internal scratch']
  %s0 = inlined_call_operand.hbm [shape: f32[8,256], index: 0, kind: input, shape index: {}]
  %s1 = inlined_call_operand.hbm [shape: s16[8,256], index: 1, kind: output, shape index: {}]
  %s2 = sld [smem:[#allocation0]]
  $region18: #{tpu_custom_call.1} parent=0
    _
  %s4 = ssub.s32 1, %s2
  %s5 = scalar_select 0, %s4, %s2
  $region1: #{tpu_custom_call.1} parent=0
    #allocation2 [shape = 'u8[8192]{0}', space=vmem, size = 0x2000, scoped, tag = 'input window, operand 0, single buffered']
    #allocation3 [shape = 's32[1]{0}', space=sflag, size = 0x4, scoped, tag = 'scoped memory for tpu_custom_call.1']
    #allocation4 [shape = 's32[1]{0}', space=sflag, size = 0x4, scoped, tag = 'scoped memory for tpu_custom_call.1']
    #allocation5 [shape = 'u8[4096]{0}', space=vmem, size = 0x1000, scoped, tag = 'output window, operand 0, single buffered']
    %6 = vsyncpa [#allocation3], 0
    %7 = vsyncpa [#allocation4], 0
    // Predicated region
    $region2: #{tpu_custom_call.1} parent=1 // pred_check
      _
    $region3: #{tpu_custom_call.1} parent=1 // pred_check_branch
      %9 = sbr.rel (0) target = $region5
    $region4: #{tpu_custom_call.1} parent=1 // pred_region
      %11 = vsyncadd [#allocation3], 0
      %s13 = sshll.u32 %s0, 4
      %s14 = int_to_ptr.hbm [resolvable:$true] %s13
      %s15 = sshll.u32 [#allocation2], 4
      %s16 = int_to_ptr.vmem [resolvable:$true] %s15
      %18 = dma.hbm_to_vmem [thread:$0]  %s14, 256, %s16, [#allocation3]
    $region5: #{tpu_custom_call.1} parent=1 // pred_fallthru
      _
    // Predicated region
    $region6: #{tpu_custom_call.1} parent=1 // pred_check
      _
    $region7: #{tpu_custom_call.1} parent=1 // pred_check_branch
      %20 = sbr.rel (0) target = $region9
    $region8: #{tpu_custom_call.1} parent=1 // pred_region
      %22 = dma.done [#allocation3], 256
    $region9: #{tpu_custom_call.1} parent=1 // pred_fallthru
      _
    %v23 = vld [vmem:[#allocation2] sm:$0xff]
    %v24 = vld [vmem:[#allocation2 + $0x8] sm:$0xff]
    %vm25 = vcmp.ge.f32.partialorder %v23, -0.25
    %vm26 = vcmp.ge.f32.partialorder %v24, -0.25
    %v27 = vsel %vm25, 2, 0
    %v28 = vsel %vm26, 2, 0
    %v29 = vadd.s32 %v27, 3
    %v30 = vadd.s32 %v28, 3
    %vm31 = vcmp.ge.f32.partialorder %v23, 1.25
    %vm32 = vcmp.ge.f32.partialorder %v24, 1.25
    %v33 = vsel %vm31, 2, 0
    %v34 = vsel %vm32, 2, 0
    %v35 = vadd.s32 %v29, %v33
    %v36 = vadd.s32 %v30, %v34
    %v37 = vpack.c.b16 %v36, %v35
    %38 = vst [vmem:[#allocation5] sm:$0xff] %v37
    // Predicated region
    $region10: #{tpu_custom_call.1} parent=1 // pred_check
      _
    $region11: #{tpu_custom_call.1} parent=1 // pred_check_branch
      %40 = sbr.rel (0) target = $region13
    $region12: #{tpu_custom_call.1} parent=1 // pred_region
      %42 = vsyncadd [#allocation4], 0
      %s44 = sshll.u32 [#allocation5], 4
      %s45 = int_to_ptr.vmem [resolvable:$true] %s44
      %s46 = sshll.u32 %s1, 4
      %s47 = int_to_ptr.hbm [resolvable:$true] %s46
      %49 = dma.vmem_to_hbm [thread:$0]  %s45, 128, %s47, [#allocation4]
    $region13: #{tpu_custom_call.1} parent=1 // pred_fallthru
      _
    // Predicated region
    $region14: #{tpu_custom_call.1} parent=1 // pred_check
      _
    $region15: #{tpu_custom_call.1} parent=1 // pred_check_branch
      %51 = sbr.rel (0) target = $region17
    $region16: #{tpu_custom_call.1} parent=1 // pred_region
      %53 = dma.done [#allocation4], 128
    $region17: #{tpu_custom_call.1} parent=1 // pred_fallthru
      _
    %54 = vsyncpa [#allocation3], 1
    %55 = vsyncpa [#allocation4], 1

</llo_original>
